<compile_context>
chip_gen: v6e
topology: v6e:2x2x1
jax: 0.10.0
libtpu: 0.0.40
codegen_flags: <defaults>
</compile_context>

<pallas_src>
import jax
import jax.numpy as jnp
from jax.experimental import pallas as pl
from jax.experimental.pallas import tpu as pltpu


def _round_up(n, m):
    return (n + m - 1) // m * m


def _cdiv(a, b):
    return (a + b - 1) // b


def _sigmoid(z):
    # sigmoid(z) == 0.5 * tanh(0.5 * z) + 0.5  -> exactly one EUP op per elem.
    return 0.5 * jnp.tanh(0.5 * z) + 0.5


def _ffn_kernel(x_ref, w1_ref, b1_ref, w2_ref, b2_ref, w3_ref, o_ref):
    # ----- Layer 1: Linear(3 -> H1) + Sigmoid.  K=3 is useless work for the
    # MXU (K padded 3->8 then pushed through the systolic array), so do it as
    # d_in broadcast-FMAs on the VPU instead.
    x = x_ref[...]                                  # (TB, d_in)  f32
    w1 = w1_ref[...]                                # (d_in, H1P) f32
    z1 = b1_ref[...]                                # (1, H1P) broadcasts up
    for j in range(x_ref.shape[1]):                 # d_in is tiny & static
        z1 = z1 + x[:, j:j + 1] * w1[j:j + 1, :]
    h1 = _sigmoid(z1)                               # (TB, H1P) f32 (EUP tanh)

    # ----- Layer 2: Linear(H1 -> H2) + Sigmoid — the one real matmul (MXU).
    # Operands are bf16 by default (w2_ref dtype); accumulation is always f32.
    z2 = jnp.dot(h1.astype(w2_ref.dtype), w2_ref[...],
                 preferred_element_type=jnp.float32) + b2_ref[...]
    h2 = _sigmoid(z2)                               # (TB, H2P) f32

    # ----- Layer 3: Linear(H2 -> 1), bias=False.  N=1 would waste 127/128 MXU
    # output lanes, so do multiply + lane reduction on VPU+XLU instead.
    out = jnp.sum(h2 * w3_ref[...], axis=-1, keepdims=True)   # (TB, 1)
    o_ref[...] = out.astype(o_ref.dtype)


def prepare_params(w1, b1, w2, b2, w3, *, matmul_dtype=jnp.bfloat16):
    """One-time weight prep (hoisted out of the per-call path).

    PyTorch layout W:(out,in) -> transposed to (in,out); hidden dims zero-padded
    to multiples of 128; biases made (1, dim); w3 kept as a (1, H2P) row vector.
    Zero-padding w2/w3 ROWS guarantees the sigmoid(0)=0.5 values living in the
    padded lanes of h1/h2 contribute exactly 0 to the result.
    `matmul_dtype` controls the storage dtype of the big layer-2 weight only
    (bf16 default: MXU-native on v5e/v6e/v7x, halves the dominant weight DMA).
    Pass jnp.float32 if bit-level parity with the f32 PyTorch model is needed.
    """
    d_in, h1d, h2d = w1.shape[1], w1.shape[0], w2.shape[0]
    h1p, h2p = _round_up(h1d, 128), _round_up(h2d, 128)

    f32 = jnp.float32
    w1t = jnp.zeros((d_in, h1p), f32).at[:, :h1d].set(w1.T.astype(f32))
    b1p = jnp.zeros((1, h1p), f32).at[0, :h1d].set(b1.astype(f32))
    w2t = (jnp.zeros((h1p, h2p), f32).at[:h1d, :h2d].set(w2.T.astype(f32))
           .astype(matmul_dtype))
    b2p = jnp.zeros((1, h2p), f32).at[0, :h2d].set(b2.astype(f32))
    w3r = jnp.zeros((1, h2p), f32).at[0, :h2d].set(w3[0].astype(f32))
    return (w1t, b1p, w2t, b2p, w3r)


def _choose_tiles(b, *, cap=1024, split_threshold=64):
    """Balanced batch tiling.

    - tiles are multiples of 8 sublanes,
    - tile size capped at `cap` rows (weights resident; per-tile intermediates
      fit comfortably under the explicit 32 MiB VMEM limit),
    - batches >= split_threshold get >= 2 tiles so v7x's two TensorCores both
      engage via dimension_semantics=("parallel",),
    - tiles are balanced (cdiv) so batches just above a cap multiple no longer
      pad up by ~2x.
    """
    n_tiles = _cdiv(b, cap)
    if b >= split_threshold:
        n_tiles = max(n_tiles, 2)
    tb = _round_up(_cdiv(b, n_tiles), 8)
    n_tiles = _cdiv(b, tb)
    b_pad = n_tiles * tb
    return tb, n_tiles, b_pad


def feedforward_network(x, prepped):
    """x: (B, d_in) f32.  prepped: output of prepare_params()."""
    w1t, b1p, w2t, b2p, w3r = prepped
    b, d_in = x.shape
    h1p = w1t.shape[1]
    h2p = w2t.shape[1]

    tb, n_tiles, b_pad = _choose_tiles(b)
    if b_pad != b:
        x = jnp.zeros((b_pad, d_in), x.dtype).at[:b, :].set(x)

    out = pl.pallas_call(
        _ffn_kernel,
        out_shape=jax.ShapeDtypeStruct((b_pad, 1), jnp.float32),
        grid_spec=pltpu.PrefetchScalarGridSpec(
            num_scalar_prefetch=0,
            grid=(n_tiles,),
            in_specs=[
                pl.BlockSpec((tb, d_in), lambda i: (i, 0)),    # x: tiled over batch
                pl.BlockSpec((d_in, h1p), lambda i: (0, 0)),   # weights: resident
                pl.BlockSpec((1, h1p), lambda i: (0, 0)),
                pl.BlockSpec((h1p, h2p), lambda i: (0, 0)),
                pl.BlockSpec((1, h2p), lambda i: (0, 0)),
                pl.BlockSpec((1, h2p), lambda i: (0, 0)),
            ],
            out_specs=pl.BlockSpec((tb, 1), lambda i: (i, 0)),
        ),
        compiler_params=pltpu.CompilerParams(
            # v7x: split batch tiles over the 2 TensorCores.
            dimension_semantics=("parallel",),
            # Explicit limit: safe on v5e (16 MiB default scoped), well under
            # v7x's 64 MiB physical VMEM, matches v6e/v7x default.
            vmem_limit_bytes=32 * 1024 * 1024,
        ),
    )(x, w1t, b1p, w2t, b2p, w3r)
    return out[:b]


def init_params(key, nb_of_inputs=3, nb_of_outputs=1, h=(600, 200)):
    """Mimics PyTorch nn.Linear default init U(-1/sqrt(fan_in), +1/sqrt(fan_in)).
    Last layer has bias=False, as in the roseNNa Net."""
    dims = [nb_of_inputs] + list(h) + [nb_of_outputs]
    params = []
    for i in range(len(dims) - 1):
        fan_in, fan_out = dims[i], dims[i + 1]
        key, kw, kb = jax.random.split(key, 3)
        bound = 1.0 / float(fan_in) ** 0.5
        w = jax.random.uniform(kw, (fan_out, fan_in), jnp.float32, -bound, bound)
        if i == len(dims) - 2:
            params.append((w, None))              # final Linear: bias=False
        else:
            bvec = jax.random.uniform(kb, (fan_out,), jnp.float32, -bound, bound)
            params.append((w, bvec))
    return params


def _reference(x, w1, b1, w2, b2, w3):
    h1 = jax.nn.sigmoid(x @ w1.T + b1)
    h2 = jax.nn.sigmoid(h1 @ w2.T + b2)
    return h2 @ w3.T                              # last Linear has no bias


if __name__ == "__main__":
    key = jax.random.PRNGKey(0)
    nb_in, nb_out = 3, 1
    hidden = [600, 200]

    key, kx = jax.random.split(key)
    (w1, b1), (w2, b2), (w3, _) = init_params(key, nb_in, nb_out, hidden)

    # --- small batch (single tile) ---
    batch = 8
    x = jax.random.normal(kx, (batch, nb_in), jnp.float32)
    y_ref = _reference(x, w1, b1, w2, b2, w3)

    # f32 matmul weights: faithful semantics, tight tolerance.
    pf32 = prepare_params(w1, b1, w2, b2, w3, matmul_dtype=jnp.float32)
    y = jax.block_until_ready(feedforward_network(x, pf32))
    assert y.shape == (batch, nb_out)
    assert jnp.allclose(y, y_ref, atol=2e-5, rtol=2e-5)

    # bf16 layer-2 MXU operands (the performance default), f32 accumulation.
    pbf16 = prepare_params(w1, b1, w2, b2, w3)     # matmul_dtype=bf16 default
    y_bf16 = jax.block_until_ready(feedforward_network(x, pbf16))
    assert jnp.allclose(y_bf16, y_ref, atol=5e-2, rtol=5e-2)

    # --- mid-size batch: exercises balanced multi-tile grid (>=2 tiles) ---
    batch2 = 200
    key, kx2 = jax.random.split(key)
    x2 = jax.random.normal(kx2, (batch2, nb_in), jnp.float32)
    y2_ref = _reference(x2, w1, b1, w2, b2, w3)
    y2 = jax.block_until_ready(feedforward_network(x2, pbf16))
    assert y2.shape == (batch2, nb_out)
    assert jnp.allclose(y2, y2_ref, atol=5e-2, rtol=5e-2)

    print("KERNEL_OK")
</pallas_src>

<mosaic_0001>
module attributes {stable_mosaic.version = 11 : i64} {
  func.func @_ffn_kernel(%arg0: i32, %arg1: memref<8x3xf32, #tpu.memory_space<vmem>>, %arg2: memref<3x640xf32, #tpu.memory_space<vmem>>, %arg3: memref<1x640xf32, #tpu.memory_space<vmem>>, %arg4: memref<640x256xf32, #tpu.memory_space<vmem>>, %arg5: memref<1x256xf32, #tpu.memory_space<vmem>>, %arg6: memref<1x256xf32, #tpu.memory_space<vmem>>, %arg7: memref<8x1xf32, #tpu.memory_space<vmem>>) attributes {dimension_semantics = [#tpu.dimension_semantics<parallel>], iteration_bounds = array<i64: 1>, scalar_prefetch = 0 : i64, scratch_operands = 0 : i64, tpu.core_type = #tpu.core_type<tc>, window_params = [{transform_indices = @transform_0, window_bounds = array<i64: 8, 3>}, {pipeline_mode = #tpu.pipeline_mode<synchronous>, transform_indices = @transform_1, window_bounds = array<i64: 3, 640>}, {pipeline_mode = #tpu.pipeline_mode<synchronous>, transform_indices = @transform_2, window_bounds = array<i64: 1, 640>}, {pipeline_mode = #tpu.pipeline_mode<synchronous>, transform_indices = @transform_3, window_bounds = array<i64: 640, 256>}, {pipeline_mode = #tpu.pipeline_mode<synchronous>, transform_indices = @transform_4, window_bounds = array<i64: 1, 256>}, {pipeline_mode = #tpu.pipeline_mode<synchronous>, transform_indices = @transform_5, window_bounds = array<i64: 1, 256>}, {transform_indices = @transform_6, window_bounds = array<i64: 8, 1>}]} {
    %c0 = arith.constant 0 : index
    %c0_0 = arith.constant 0 : index
    %0 = vector.load %arg1[%c0, %c0_0] : memref<8x3xf32, #tpu.memory_space<vmem>>, vector<8x3xf32>
    %c0_1 = arith.constant 0 : index
    %c0_2 = arith.constant 0 : index
    %1 = vector.load %arg2[%c0_1, %c0_2] : memref<3x640xf32, #tpu.memory_space<vmem>>, vector<3x640xf32>
    %c0_3 = arith.constant 0 : index
    %c0_4 = arith.constant 0 : index
    %2 = vector.load %arg3[%c0_3, %c0_4] : memref<1x640xf32, #tpu.memory_space<vmem>>, vector<1x640xf32>
    %3 = vector.extract_strided_slice %0 {offsets = [0, 0], sizes = [8, 1], strides = [1, 1]} : vector<8x3xf32> to vector<8x1xf32>
    %4 = vector.extract_strided_slice %1 {offsets = [0, 0], sizes = [1, 640], strides = [1, 1]} : vector<3x640xf32> to vector<1x640xf32>
    %5 = vector.broadcast %3 : vector<8x1xf32> to vector<8x640xf32>
    %6 = vector.broadcast %4 : vector<1x640xf32> to vector<8x640xf32>
    %7 = arith.mulf %5, %6 : vector<8x640xf32>
    %8 = vector.broadcast %2 : vector<1x640xf32> to vector<8x640xf32>
    %9 = arith.addf %8, %7 : vector<8x640xf32>
    %10 = vector.extract_strided_slice %0 {offsets = [0, 1], sizes = [8, 1], strides = [1, 1]} : vector<8x3xf32> to vector<8x1xf32>
    %11 = vector.extract_strided_slice %1 {offsets = [1, 0], sizes = [1, 640], strides = [1, 1]} : vector<3x640xf32> to vector<1x640xf32>
    %12 = vector.broadcast %10 : vector<8x1xf32> to vector<8x640xf32>
    %13 = vector.broadcast %11 : vector<1x640xf32> to vector<8x640xf32>
    %14 = arith.mulf %12, %13 : vector<8x640xf32>
    %15 = arith.addf %9, %14 : vector<8x640xf32>
    %16 = vector.extract_strided_slice %0 {offsets = [0, 2], sizes = [8, 1], strides = [1, 1]} : vector<8x3xf32> to vector<8x1xf32>
    %17 = vector.extract_strided_slice %1 {offsets = [2, 0], sizes = [1, 640], strides = [1, 1]} : vector<3x640xf32> to vector<1x640xf32>
    %18 = vector.broadcast %16 : vector<8x1xf32> to vector<8x640xf32>
    %19 = vector.broadcast %17 : vector<1x640xf32> to vector<8x640xf32>
    %20 = arith.mulf %18, %19 : vector<8x640xf32>
    %21 = arith.addf %15, %20 : vector<8x640xf32>
    %cst = arith.constant 5.000000e-01 : f32
    %22 = vector.broadcast %cst : f32 to vector<8x640xf32>
    %23 = arith.mulf %22, %21 : vector<8x640xf32>
    %24 = math.tanh %23 : vector<8x640xf32>
    %cst_5 = arith.constant 5.000000e-01 : f32
    %25 = vector.broadcast %cst_5 : f32 to vector<8x640xf32>
    %26 = arith.mulf %25, %24 : vector<8x640xf32>
    %cst_6 = arith.constant 5.000000e-01 : f32
    %27 = vector.broadcast %cst_6 : f32 to vector<8x640xf32>
    %28 = arith.addf %26, %27 : vector<8x640xf32>
    %c0_7 = arith.constant 0 : index
    %c0_8 = arith.constant 0 : index
    %29 = vector.load %arg4[%c0_7, %c0_8] : memref<640x256xf32, #tpu.memory_space<vmem>>, vector<640x256xf32>
    %cst_9 = arith.constant dense<0.000000e+00> : vector<8x256xf32>
    %30 = tpu.matmul %28, %29, %cst_9 {dimension_numbers = #tpu.dot_dimension_numbers<[1], [0], [0], [1], [0, 0, 1, 1], [], []>} : vector<8x640xf32>, vector<640x256xf32>, vector<8x256xf32> -> vector<8x256xf32>
    %c0_10 = arith.constant 0 : index
    %c0_11 = arith.constant 0 : index
    %31 = vector.load %arg5[%c0_10, %c0_11] : memref<1x256xf32, #tpu.memory_space<vmem>>, vector<1x256xf32>
    %32 = vector.broadcast %31 : vector<1x256xf32> to vector<8x256xf32>
    %33 = arith.addf %30, %32 : vector<8x256xf32>
    %cst_12 = arith.constant 5.000000e-01 : f32
    %34 = vector.broadcast %cst_12 : f32 to vector<8x256xf32>
    %35 = arith.mulf %34, %33 : vector<8x256xf32>
    %36 = math.tanh %35 : vector<8x256xf32>
    %cst_13 = arith.constant 5.000000e-01 : f32
    %37 = vector.broadcast %cst_13 : f32 to vector<8x256xf32>
    %38 = arith.mulf %37, %36 : vector<8x256xf32>
    %cst_14 = arith.constant 5.000000e-01 : f32
    %39 = vector.broadcast %cst_14 : f32 to vector<8x256xf32>
    %40 = arith.addf %38, %39 : vector<8x256xf32>
    %c0_15 = arith.constant 0 : index
    %c0_16 = arith.constant 0 : index
    %41 = vector.load %arg6[%c0_15, %c0_16] : memref<1x256xf32, #tpu.memory_space<vmem>>, vector<1x256xf32>
    %42 = vector.broadcast %41 : vector<1x256xf32> to vector<8x256xf32>
    %43 = arith.mulf %40, %42 : vector<8x256xf32>
    %cst_17 = arith.constant dense<0.000000e+00> : vector<8xf32>
    %44 = vector.multi_reduction <add>, %43, %cst_17 [1] : vector<8x256xf32> to vector<8xf32>
    %45 = vector.shape_cast %44 : vector<8xf32> to vector<8x1xf32>
    %c0_18 = arith.constant 0 : index
    %c0_19 = arith.constant 0 : index
    %46 = vector.load %arg7[%c0_18, %c0_19] : memref<8x1xf32, #tpu.memory_space<vmem>>, vector<8x1xf32>
    tpu.vector_store %arg7[%c0_18, %c0_19], %45 {strides = array<i32>} : memref<8x1xf32, #tpu.memory_space<vmem>>, vector<8x1xf32>,
    return
  }
  func.func @transform_0(%arg0: i32) -> (i32, i32) {
    %c0_i32 = arith.constant 0 : i32
    %c0_i32_0 = arith.constant 0 : i32
    return %arg0, %c0_i32 : i32, i32
  }
  func.func @transform_1(%arg0: i32) -> (i32, i32) {
    %c0_i32 = arith.constant 0 : i32
    %c0_i32_0 = arith.constant 0 : i32
    %c0_i32_1 = arith.constant 0 : i32
    return %c0_i32, %c0_i32_0 : i32, i32
  }
  func.func @transform_2(%arg0: i32) -> (i32, i32) {
    %c0_i32 = arith.constant 0 : i32
    %c0_i32_0 = arith.constant 0 : i32
    %c0_i32_1 = arith.constant 0 : i32
    return %c0_i32, %c0_i32_0 : i32, i32
  }
  func.func @transform_3(%arg0: i32) -> (i32, i32) {
    %c0_i32 = arith.constant 0 : i32
    %c0_i32_0 = arith.constant 0 : i32
    %c0_i32_1 = arith.constant 0 : i32
    return %c0_i32, %c0_i32_0 : i32, i32
  }
  func.func @transform_4(%arg0: i32) -> (i32, i32) {
    %c0_i32 = arith.constant 0 : i32
    %c0_i32_0 = arith.constant 0 : i32
    %c0_i32_1 = arith.constant 0 : i32
    return %c0_i32, %c0_i32_0 : i32, i32
  }
  func.func @transform_5(%arg0: i32) -> (i32, i32) {
    %c0_i32 = arith.constant 0 : i32
    %c0_i32_0 = arith.constant 0 : i32
    %c0_i32_1 = arith.constant 0 : i32
    return %c0_i32, %c0_i32_0 : i32, i32
  }
  func.func @transform_6(%arg0: i32) -> (i32, i32) {
    %c0_i32 = arith.constant 0 : i32
    %c0_i32_0 = arith.constant 0 : i32
    return %arg0, %c0_i32 : i32, i32
  }
}

</mosaic_0001>

<llo_original>
// kernel: tpu_custom_call.1
$region0: #{tpu_custom_call.1}
  #allocation0 [shape = 'u32[]', space=smem, size = 0x4, offset = 0x4, fixed_abs, tag = 'smem constant byte address 0x4 - core index']
  #allocation1 [shape = 'u32[144,128]{1,0:T(1,128)}', space=vmem, size = 0x12000, scoped, tag = 'internal scratch']
  %s0 = inlined_call_operand.vmem [shape: f32[8,3], index: 0, kind: input, shape index: {}]
  %s1 = inlined_call_operand.hbm [shape: f32[3,640], index: 1, kind: input, shape index: {}]
  %s2 = inlined_call_operand.vmem [shape: f32[1,640], index: 2, kind: input, shape index: {}]
  %s3 = inlined_call_operand.hbm [shape: f32[640,256], index: 3, kind: input, shape index: {}]
  %s4 = inlined_call_operand.vmem [shape: f32[1,256], index: 4, kind: input, shape index: {}]
  %s5 = inlined_call_operand.vmem [shape: f32[1,256], index: 5, kind: input, shape index: {}]
  %s6 = inlined_call_operand.vmem [shape: f32[8,1], index: 6, kind: output, shape index: {}]
  %s7 = sld [smem:[#allocation0]]
  $region42: #{tpu_custom_call.1} parent=0
    _
  %s9 = ssub.s32 1, %s7
  %s10 = scalar_select 0, %s9, %s7
  $region1: #{tpu_custom_call.1} parent=0
    #allocation2 [shape = 'u8[10240]{0}', space=vmem, size = 0x2800, scoped, tag = 'input window, operand 1, single buffered']
    #allocation3 [shape = 's32[1]{0}', space=sflag, size = 0x4, scoped, tag = 'scoped memory for tpu_custom_call.1']
    #allocation4 [shape = 'u8[655360]{0}', space=vmem, size = 0xa0000, scoped, tag = 'input window, operand 3, single buffered']
    #allocation5 [shape = 's32[1]{0}', space=sflag, size = 0x4, scoped, tag = 'scoped memory for tpu_custom_call.1']
    %11 = vsyncpa [#allocation3], 0
    %12 = vsyncpa [#allocation5], 0
    // Predicated region
    $region2: #{tpu_custom_call.1} parent=1 // pred_check
      _
    $region3: #{tpu_custom_call.1} parent=1 // pred_check_branch
      %14 = sbr.rel (0) target = $region5
    $region4: #{tpu_custom_call.1} parent=1 // pred_region
      _
    $region5: #{tpu_custom_call.1} parent=1 // pred_fallthru
      _
    // Predicated region
    $region6: #{tpu_custom_call.1} parent=1 // pred_check
      _
    $region7: #{tpu_custom_call.1} parent=1 // pred_check_branch
      %16 = sbr.rel (0) target = $region9
    $region8: #{tpu_custom_call.1} parent=1 // pred_region
      %s18 = ssub.s32 320, 320
      %19 = vsyncadd [#allocation3], %s18
      %s21 = sshll.u32 [#allocation2], 4
      %s22 = int_to_ptr.vmem [resolvable:$true] %s21
      %24 = dma.hbm_to_vmem [thread:$0]  %s1, 320, %s22, [#allocation3]
    $region9: #{tpu_custom_call.1} parent=1 // pred_fallthru
      _
    // Predicated region
    $region10: #{tpu_custom_call.1} parent=1 // pred_check
      _
    $region11: #{tpu_custom_call.1} parent=1 // pred_check_branch
      %26 = sbr.rel (0) target = $region13
    $region12: #{tpu_custom_call.1} parent=1 // pred_region
      _
    $region13: #{tpu_custom_call.1} parent=1 // pred_fallthru
      _
    // Predicated region
    $region14: #{tpu_custom_call.1} parent=1 // pred_check
      _
    $region15: #{tpu_custom_call.1} parent=1 // pred_check_branch
      %28 = sbr.rel (0) target = $region17
    $region16: #{tpu_custom_call.1} parent=1 // pred_region
      %s30 = ssub.s32 20480, 20480
      %31 = vsyncadd [#allocation5], %s30
      %s32 = sshll.u32 [#allocation4], 4
      %s33 = int_to_ptr.vmem [resolvable:$true] %s32
      %38 = dma.hbm_to_vmem [thread:$0]  %s3, 20480, %s33, [#allocation5], 256, 256, 16
    $region17: #{tpu_custom_call.1} parent=1 // pred_fallthru
      _
    // Predicated region
    $region18: #{tpu_custom_call.1} parent=1 // pred_check
      _
    $region19: #{tpu_custom_call.1} parent=1 // pred_check_branch
      %40 = sbr.rel (0) target = $region21
    $region20: #{tpu_custom_call.1} parent=1 // pred_region
      _
    $region21: #{tpu_custom_call.1} parent=1 // pred_fallthru
      _
    // Predicated region
    $region22: #{tpu_custom_call.1} parent=1 // pred_check
      _
    $region23: #{tpu_custom_call.1} parent=1 // pred_check_branch
      %42 = sbr.rel (0) target = $region25
    $region24: #{tpu_custom_call.1} parent=1 // pred_region
      _
    $region25: #{tpu_custom_call.1} parent=1 // pred_fallthru
      _
    // Predicated region
    $region26: #{tpu_custom_call.1} parent=1 // pred_check
      _
    $region27: #{tpu_custom_call.1} parent=1 // pred_check_branch
      %44 = sbr.rel (0) target = $region29
    $region28: #{tpu_custom_call.1} parent=1 // pred_region
      %45 = dma.done [#allocation3], 320
    $region29: #{tpu_custom_call.1} parent=1 // pred_fallthru
      _
    // Predicated region
    $region30: #{tpu_custom_call.1} parent=1 // pred_check
      _
    $region31: #{tpu_custom_call.1} parent=1 // pred_check_branch
      %47 = sbr.rel (0) target = $region33
    $region32: #{tpu_custom_call.1} parent=1 // pred_region
      %48 = dma.done [#allocation5], 20480
    $region33: #{tpu_custom_call.1} parent=1 // pred_fallthru
      _
    %v49 = vld [vmem:[%s0] sm:$0xff]
    %v50 = vld [vmem:[#allocation2] sm:$0x77]
    %v51 = vld [vmem:[#allocation2 + $0x8] sm:$0x77]
    %v52 = vld [vmem:[#allocation2 + $0x10] sm:$0x7]
    %v53 = vld [vmem:[%s2] sm:$0x1f]
    %55 = vset.pattern.permute.xlu0 0
    %56 = vperm.xlu0 %55, %v49
    %v57 = vpop.permute.xlu0 %56
    %v62 = vlaneseq
    %v63 = vshrl.u32 %v62, 7
    %v64 = vsub.s32 0, %v63
    %v65 = vrot.slane %v50, %v64
    %v66 = vlaneseq
    %v67 = vshrl.u32 %v66, 7
    %v68 = vsub.s32 4, %v67
    %v69 = vrot.slane %v50, %v68
    %v70 = vlaneseq
    %v71 = vshrl.u32 %v70, 7
    %v72 = vsub.s32 0, %v71
    %v73 = vrot.slane %v51, %v72
    %v74 = vlaneseq
    %v75 = vshrl.u32 %v74, 7
    %v76 = vsub.s32 4, %v75
    %v77 = vrot.slane %v51, %v76
    %v78 = vlaneseq
    %v79 = vshrl.u32 %v78, 7
    %v80 = vsub.s32 0, %v79
    %v81 = vrot.slane %v52, %v80
    %v87 = vlaneseq
    %v88 = vshrl.u32 %v87, 7
    %v89 = vsub.s32 0, %v88
    %v90 = vrot.slane %v65, %v89
    %v91 = vlaneseq
    %v92 = vshrl.u32 %v91, 7
    %v93 = vsub.s32 0, %v92
    %v94 = vrot.slane %v69, %v93
    %v95 = vlaneseq
    %v96 = vshrl.u32 %v95, 7
    %v97 = vsub.s32 0, %v96
    %v98 = vrot.slane %v73, %v97
    %v99 = vlaneseq
    %v100 = vshrl.u32 %v99, 7
    %v101 = vsub.s32 0, %v100
    %v102 = vrot.slane %v77, %v101
    %v103 = vlaneseq
    %v104 = vshrl.u32 %v103, 7
    %v105 = vsub.s32 0, %v104
    %v106 = vrot.slane %v81, %v105
    %v107 = vmul.f32 %v57, %v90
    %v108 = vmul.f32 %v57, %v94
    %v109 = vmul.f32 %v57, %v98
    %v110 = vmul.f32 %v57, %v102
    %v111 = vmul.f32 %v57, %v106
    %v113 = vlaneseq
    %v114 = vshrl.u32 %v113, 7
    %v115 = vsub.s32 0, %v114
    %v116 = vrot.slane %v53, %v115
    %v117 = vlaneseq
    %v118 = vshrl.u32 %v117, 7
    %v119 = vsub.s32 1, %v118
    %v120 = vrot.slane %v53, %v119
    %v121 = vlaneseq
    %v122 = vshrl.u32 %v121, 7
    %v123 = vsub.s32 2, %v122
    %v124 = vrot.slane %v53, %v123
    %v125 = vlaneseq
    %v126 = vshrl.u32 %v125, 7
    %v127 = vsub.s32 3, %v126
    %v128 = vrot.slane %v53, %v127
    %v129 = vlaneseq
    %v130 = vshrl.u32 %v129, 7
    %v131 = vsub.s32 4, %v130
    %v132 = vrot.slane %v53, %v131
    %v138 = vadd.f32 %v116, %v107
    %v139 = vadd.f32 %v120, %v108
    %v140 = vadd.f32 %v124, %v109
    %v141 = vadd.f32 %v128, %v110
    %v142 = vadd.f32 %v132, %v111
    %143 = vset.pattern.permute.xlu0 1
    %144 = vperm.xlu0 %143, %v49
    %v145 = vpop.permute.xlu0 %144
    %v147 = vlaneseq
    %v148 = vshrl.u32 %v147, 7
    %v149 = vsub.s32 1, %v148
    %v150 = vrot.slane %v50, %v149
    %v151 = vlaneseq
    %v152 = vshrl.u32 %v151, 7
    %v153 = vsub.s32 5, %v152
    %v154 = vrot.slane %v50, %v153
    %v155 = vlaneseq
    %v156 = vshrl.u32 %v155, 7
    %v157 = vsub.s32 1, %v156
    %v158 = vrot.slane %v51, %v157
    %v159 = vlaneseq
    %v160 = vshrl.u32 %v159, 7
    %v161 = vsub.s32 5, %v160
    %v162 = vrot.slane %v51, %v161
    %v163 = vlaneseq
    %v164 = vshrl.u32 %v163, 7
    %v165 = vsub.s32 1, %v164
    %v166 = vrot.slane %v52, %v165
    %v172 = vlaneseq
    %v173 = vshrl.u32 %v172, 7
    %v174 = vsub.s32 1, %v173
    %v175 = vrot.slane %v150, %v174
    %v176 = vlaneseq
    %v177 = vshrl.u32 %v176, 7
    %v178 = vsub.s32 1, %v177
    %v179 = vrot.slane %v154, %v178
    %v180 = vlaneseq
    %v181 = vshrl.u32 %v180, 7
    %v182 = vsub.s32 1, %v181
    %v183 = vrot.slane %v158, %v182
    %v184 = vlaneseq
    %v185 = vshrl.u32 %v184, 7
    %v186 = vsub.s32 1, %v185
    %v187 = vrot.slane %v162, %v186
    %v188 = vlaneseq
    %v189 = vshrl.u32 %v188, 7
    %v190 = vsub.s32 1, %v189
    %v191 = vrot.slane %v166, %v190
    %v192 = vmul.f32 %v145, %v175
    %v193 = vmul.f32 %v145, %v179
    %v194 = vmul.f32 %v145, %v183
    %v195 = vmul.f32 %v145, %v187
    %v196 = vmul.f32 %v145, %v191
    %v197 = vadd.f32 %v138, %v192
    %v198 = vadd.f32 %v139, %v193
    %v199 = vadd.f32 %v140, %v194
    %v200 = vadd.f32 %v141, %v195
    %v201 = vadd.f32 %v142, %v196
    %202 = vset.pattern.permute.xlu0 2
    %203 = vperm.xlu0 %202, %v49
    %v204 = vpop.permute.xlu0 %203
    %v206 = vlaneseq
    %v207 = vshrl.u32 %v206, 7
    %v208 = vsub.s32 2, %v207
    %v209 = vrot.slane %v50, %v208
    %v210 = vlaneseq
    %v211 = vshrl.u32 %v210, 7
    %v212 = vsub.s32 6, %v211
    %v213 = vrot.slane %v50, %v212
    %v214 = vlaneseq
    %v215 = vshrl.u32 %v214, 7
    %v216 = vsub.s32 2, %v215
    %v217 = vrot.slane %v51, %v216
    %v218 = vlaneseq
    %v219 = vshrl.u32 %v218, 7
    %v220 = vsub.s32 6, %v219
    %v221 = vrot.slane %v51, %v220
    %v222 = vlaneseq
    %v223 = vshrl.u32 %v222, 7
    %v224 = vsub.s32 2, %v223
    %v225 = vrot.slane %v52, %v224
    %v231 = vlaneseq
    %v232 = vshrl.u32 %v231, 7
    %v233 = vsub.s32 2, %v232
    %v234 = vrot.slane %v209, %v233
    %v235 = vlaneseq
    %v236 = vshrl.u32 %v235, 7
    %v237 = vsub.s32 2, %v236
    %v238 = vrot.slane %v213, %v237
    %v239 = vlaneseq
    %v240 = vshrl.u32 %v239, 7
    %v241 = vsub.s32 2, %v240
    %v242 = vrot.slane %v217, %v241
    %v243 = vlaneseq
    %v244 = vshrl.u32 %v243, 7
    %v245 = vsub.s32 2, %v244
    %v246 = vrot.slane %v221, %v245
    %v247 = vlaneseq
    %v248 = vshrl.u32 %v247, 7
    %v249 = vsub.s32 2, %v248
    %v250 = vrot.slane %v225, %v249
    %v251 = vmul.f32 %v204, %v234
    %v252 = vmul.f32 %v204, %v238
    %v253 = vmul.f32 %v204, %v242
    %v254 = vmul.f32 %v204, %v246
    %v255 = vmul.f32 %v204, %v250
    %v256 = vadd.f32 %v197, %v251
    %v257 = vadd.f32 %v198, %v252
    %v258 = vadd.f32 %v199, %v253
    %v259 = vadd.f32 %v200, %v254
    %v260 = vadd.f32 %v201, %v255
    %v261 = vmul.f32 %v256, 0.5
    %v262 = vmul.f32 %v257, 0.5
    %v263 = vmul.f32 %v258, 0.5
    %v264 = vmul.f32 %v259, 0.5
    %v265 = vmul.f32 %v260, 0.5
    %v266 = vtanh.pop %v261
    %v267 = vtanh.pop %v262
    %v268 = vtanh.pop %v263
    %v269 = vtanh.pop %v264
    %v270 = vtanh.pop %v265
    %v271 = vmul.f32 %v266, 0.5
    %v272 = vmul.f32 %v267, 0.5
    %v273 = vmul.f32 %v268, 0.5
    %v274 = vmul.f32 %v269, 0.5
    %v275 = vmul.f32 %v270, 0.5
    %v276 = vadd.f32 %v271, 0.5
    %v277 = vadd.f32 %v272, 0.5
    %v278 = vadd.f32 %v273, 0.5
    %v279 = vadd.f32 %v274, 0.5
    %v280 = vadd.f32 %v275, 0.5
    %v281 = vld [vmem:[#allocation4] sm:$0xff]
    %v282 = vld [vmem:[#allocation4 + $0x8] sm:$0xff]
    %v283 = vld [vmem:[#allocation4 + $0x10] sm:$0xff]
    %v284 = vld [vmem:[#allocation4 + $0x18] sm:$0xff]
    %v285 = vld [vmem:[#allocation4 + $0x20] sm:$0xff]
    %v286 = vld [vmem:[#allocation4 + $0x28] sm:$0xff]
    %v287 = vld [vmem:[#allocation4 + $0x30] sm:$0xff]
    %v288 = vld [vmem:[#allocation4 + $0x38] sm:$0xff]
    %v289 = vld [vmem:[#allocation4 + $0x40] sm:$0xff]
    %v290 = vld [vmem:[#allocation4 + $0x48] sm:$0xff]
    %v291 = vld [vmem:[#allocation4 + $0x50] sm:$0xff]
    %v292 = vld [vmem:[#allocation4 + $0x58] sm:$0xff]
    %v293 = vld [vmem:[#allocation4 + $0x60] sm:$0xff]
    %v294 = vld [vmem:[#allocation4 + $0x68] sm:$0xff]
    %v295 = vld [vmem:[#allocation4 + $0x70] sm:$0xff]
    %v296 = vld [vmem:[#allocation4 + $0x78] sm:$0xff]
    %v297 = vld [vmem:[#allocation4 + $0x80] sm:$0xff]
    %v298 = vld [vmem:[#allocation4 + $0x88] sm:$0xff]
    %v299 = vld [vmem:[#allocation4 + $0x90] sm:$0xff]
    %v300 = vld [vmem:[#allocation4 + $0x98] sm:$0xff]
    %v301 = vld [vmem:[#allocation4 + $0xa0] sm:$0xff]
    %v302 = vld [vmem:[#allocation4 + $0xa8] sm:$0xff]
    %v303 = vld [vmem:[#allocation4 + $0xb0] sm:$0xff]
    %v304 = vld [vmem:[#allocation4 + $0xb8] sm:$0xff]
    %v305 = vld [vmem:[#allocation4 + $0xc0] sm:$0xff]
    %v306 = vld [vmem:[#allocation4 + $0xc8] sm:$0xff]
    %v307 = vld [vmem:[#allocation4 + $0xd0] sm:$0xff]
    %v308 = vld [vmem:[#allocation4 + $0xd8] sm:$0xff]
    %v309 = vld [vmem:[#allocation4 + $0xe0] sm:$0xff]
    %v310 = vld [vmem:[#allocation4 + $0xe8] sm:$0xff]
    %v311 = vld [vmem:[#allocation4 + $0xf0] sm:$0xff]
    %v312 = vld [vmem:[#allocation4 + $0xf8] sm:$0xff]
    %v313 = vld [vmem:[#allocation4 + $0x100] sm:$0xff]
    %v314 = vld [vmem:[#allocation4 + $0x108] sm:$0xff]
    %v315 = vld [vmem:[#allocation4 + $0x110] sm:$0xff]
    %v316 = vld [vmem:[#allocation4 + $0x118] sm:$0xff]
    %v317 = vld [vmem:[#allocation4 + $0x120] sm:$0xff]
    %v318 = vld [vmem:[#allocation4 + $0x128] sm:$0xff]
    %v319 = vld [vmem:[#allocation4 + $0x130] sm:$0xff]
    %v320 = vld [vmem:[#allocation4 + $0x138] sm:$0xff]
    %v321 = vld [vmem:[#allocation4 + $0x140] sm:$0xff]
    %v322 = vld [vmem:[#allocation4 + $0x148] sm:$0xff]
    %v323 = vld [vmem:[#allocation4 + $0x150] sm:$0xff]
    %v324 = vld [vmem:[#allocation4 + $0x158] sm:$0xff]
    %v325 = vld [vmem:[#allocation4 + $0x160] sm:$0xff]
    %v326 = vld [vmem:[#allocation4 + $0x168] sm:$0xff]
    %v327 = vld [vmem:[#allocation4 + $0x170] sm:$0xff]
    %v328 = vld [vmem:[#allocation4 + $0x178] sm:$0xff]
    %v329 = vld [vmem:[#allocation4 + $0x180] sm:$0xff]
    %v330 = vld [vmem:[#allocation4 + $0x188] sm:$0xff]
    %v331 = vld [vmem:[#allocation4 + $0x190] sm:$0xff]
    %v332 = vld [vmem:[#allocation4 + $0x198] sm:$0xff]
    %v333 = vld [vmem:[#allocation4 + $0x1a0] sm:$0xff]
    %v334 = vld [vmem:[#allocation4 + $0x1a8] sm:$0xff]
    %v335 = vld [vmem:[#allocation4 + $0x1b0] sm:$0xff]
    %v336 = vld [vmem:[#allocation4 + $0x1b8] sm:$0xff]
    %v337 = vld [vmem:[#allocation4 + $0x1c0] sm:$0xff]
    %v338 = vld [vmem:[#allocation4 + $0x1c8] sm:$0xff]
    %v339 = vld [vmem:[#allocation4 + $0x1d0] sm:$0xff]
    %v340 = vld [vmem:[#allocation4 + $0x1d8] sm:$0xff]
    %v341 = vld [vmem:[#allocation4 + $0x1e0] sm:$0xff]
    %v342 = vld [vmem:[#allocation4 + $0x1e8] sm:$0xff]
    %v343 = vld [vmem:[#allocation4 + $0x1f0] sm:$0xff]
    %v344 = vld [vmem:[#allocation4 + $0x1f8] sm:$0xff]
    %v345 = vld [vmem:[#allocation4 + $0x200] sm:$0xff]
    %v346 = vld [vmem:[#allocation4 + $0x208] sm:$0xff]
    %v347 = vld [vmem:[#allocation4 + $0x210] sm:$0xff]
    %v348 = vld [vmem:[#allocation4 + $0x218] sm:$0xff]
    %v349 = vld [vmem:[#allocation4 + $0x220] sm:$0xff]
    %v350 = vld [vmem:[#allocation4 + $0x228] sm:$0xff]
    %v351 = vld [vmem:[#allocation4 + $0x230] sm:$0xff]
    %v352 = vld [vmem:[#allocation4 + $0x238] sm:$0xff]
    %v353 = vld [vmem:[#allocation4 + $0x240] sm:$0xff]
    %v354 = vld [vmem:[#allocation4 + $0x248] sm:$0xff]
    %v355 = vld [vmem:[#allocation4 + $0x250] sm:$0xff]
    %v356 = vld [vmem:[#allocation4 + $0x258] sm:$0xff]
    %v357 = vld [vmem:[#allocation4 + $0x260] sm:$0xff]
    %v358 = vld [vmem:[#allocation4 + $0x268] sm:$0xff]
    %v359 = vld [vmem:[#allocation4 + $0x270] sm:$0xff]
    %v360 = vld [vmem:[#allocation4 + $0x278] sm:$0xff]
    %v361 = vld [vmem:[#allocation4 + $0x280] sm:$0xff]
    %v362 = vld [vmem:[#allocation4 + $0x288] sm:$0xff]
    %v363 = vld [vmem:[#allocation4 + $0x290] sm:$0xff]
    %v364 = vld [vmem:[#allocation4 + $0x298] sm:$0xff]
    %v365 = vld [vmem:[#allocation4 + $0x2a0] sm:$0xff]
    %v366 = vld [vmem:[#allocation4 + $0x2a8] sm:$0xff]
    %v367 = vld [vmem:[#allocation4 + $0x2b0] sm:$0xff]
    %v368 = vld [vmem:[#allocation4 + $0x2b8] sm:$0xff]
    %v369 = vld [vmem:[#allocation4 + $0x2c0] sm:$0xff]
    %v370 = vld [vmem:[#allocation4 + $0x2c8] sm:$0xff]
    %v371 = vld [vmem:[#allocation4 + $0x2d0] sm:$0xff]
    %v372 = vld [vmem:[#allocation4 + $0x2d8] sm:$0xff]
    %v373 = vld [vmem:[#allocation4 + $0x2e0] sm:$0xff]
    %v374 = vld [vmem:[#allocation4 + $0x2e8] sm:$0xff]
    %v375 = vld [vmem:[#allocation4 + $0x2f0] sm:$0xff]
    %v376 = vld [vmem:[#allocation4 + $0x2f8] sm:$0xff]
    %v377 = vld [vmem:[#allocation4 + $0x300] sm:$0xff]
    %v378 = vld [vmem:[#allocation4 + $0x308] sm:$0xff]
    %v379 = vld [vmem:[#allocation4 + $0x310] sm:$0xff]
    %v380 = vld [vmem:[#allocation4 + $0x318] sm:$0xff]
    %v381 = vld [vmem:[#allocation4 + $0x320] sm:$0xff]
    %v382 = vld [vmem:[#allocation4 + $0x328] sm:$0xff]
    %v383 = vld [vmem:[#allocation4 + $0x330] sm:$0xff]
    %v384 = vld [vmem:[#allocation4 + $0x338] sm:$0xff]
    %v385 = vld [vmem:[#allocation4 + $0x340] sm:$0xff]
    %v386 = vld [vmem:[#allocation4 + $0x348] sm:$0xff]
    %v387 = vld [vmem:[#allocation4 + $0x350] sm:$0xff]
    %v388 = vld [vmem:[#allocation4 + $0x358] sm:$0xff]
    %v389 = vld [vmem:[#allocation4 + $0x360] sm:$0xff]
    %v390 = vld [vmem:[#allocation4 + $0x368] sm:$0xff]
    %v391 = vld [vmem:[#allocation4 + $0x370] sm:$0xff]
    %v392 = vld [vmem:[#allocation4 + $0x378] sm:$0xff]
    %v393 = vld [vmem:[#allocation4 + $0x380] sm:$0xff]
    %v394 = vld [vmem:[#allocation4 + $0x388] sm:$0xff]
    %v395 = vld [vmem:[#allocation4 + $0x390] sm:$0xff]
    %v396 = vld [vmem:[#allocation4 + $0x398] sm:$0xff]
    %v397 = vld [vmem:[#allocation4 + $0x3a0] sm:$0xff]
    %v398 = vld [vmem:[#allocation4 + $0x3a8] sm:$0xff]
    %v399 = vld [vmem:[#allocation4 + $0x3b0] sm:$0xff]
    %v400 = vld [vmem:[#allocation4 + $0x3b8] sm:$0xff]
    %v401 = vld [vmem:[#allocation4 + $0x3c0] sm:$0xff]
    %v402 = vld [vmem:[#allocation4 + $0x3c8] sm:$0xff]
    %v403 = vld [vmem:[#allocation4 + $0x3d0] sm:$0xff]
    %v404 = vld [vmem:[#allocation4 + $0x3d8] sm:$0xff]
    %v405 = vld [vmem:[#allocation4 + $0x3e0] sm:$0xff]
    %v406 = vld [vmem:[#allocation4 + $0x3e8] sm:$0xff]
    %v407 = vld [vmem:[#allocation4 + $0x3f0] sm:$0xff]
    %v408 = vld [vmem:[#allocation4 + $0x3f8] sm:$0xff]
    %v409 = vld [vmem:[#allocation4 + $0x400] sm:$0xff]
    %v410 = vld [vmem:[#allocation4 + $0x408] sm:$0xff]
    %v411 = vld [vmem:[#allocation4 + $0x410] sm:$0xff]
    %v412 = vld [vmem:[#allocation4 + $0x418] sm:$0xff]
    %v413 = vld [vmem:[#allocation4 + $0x420] sm:$0xff]
    %v414 = vld [vmem:[#allocation4 + $0x428] sm:$0xff]
    %v415 = vld [vmem:[#allocation4 + $0x430] sm:$0xff]
    %v416 = vld [vmem:[#allocation4 + $0x438] sm:$0xff]
    %v417 = vld [vmem:[#allocation4 + $0x440] sm:$0xff]
    %v418 = vld [vmem:[#allocation4 + $0x448] sm:$0xff]
    %v419 = vld [vmem:[#allocation4 + $0x450] sm:$0xff]
    %v420 = vld [vmem:[#allocation4 + $0x458] sm:$0xff]
    %v421 = vld [vmem:[#allocation4 + $0x460] sm:$0xff]
    %v422 = vld [vmem:[#allocation4 + $0x468] sm:$0xff]
    %v423 = vld [vmem:[#allocation4 + $0x470] sm:$0xff]
    %v424 = vld [vmem:[#allocation4 + $0x478] sm:$0xff]
    %v425 = vld [vmem:[#allocation4 + $0x480] sm:$0xff]
    %v426 = vld [vmem:[#allocation4 + $0x488] sm:$0xff]
    %v427 = vld [vmem:[#allocation4 + $0x490] sm:$0xff]
    %v428 = vld [vmem:[#allocation4 + $0x498] sm:$0xff]
    %v429 = vld [vmem:[#allocation4 + $0x4a0] sm:$0xff]
    %v430 = vld [vmem:[#allocation4 + $0x4a8] sm:$0xff]
    %v431 = vld [vmem:[#allocation4 + $0x4b0] sm:$0xff]
    %v432 = vld [vmem:[#allocation4 + $0x4b8] sm:$0xff]
    %v433 = vld [vmem:[#allocation4 + $0x4c0] sm:$0xff]
    %v434 = vld [vmem:[#allocation4 + $0x4c8] sm:$0xff]
    %v435 = vld [vmem:[#allocation4 + $0x4d0] sm:$0xff]
    %v436 = vld [vmem:[#allocation4 + $0x4d8] sm:$0xff]
    %v437 = vld [vmem:[#allocation4 + $0x4e0] sm:$0xff]
    %v438 = vld [vmem:[#allocation4 + $0x4e8] sm:$0xff]
    %v439 = vld [vmem:[#allocation4 + $0x4f0] sm:$0xff]
    %v440 = vld [vmem:[#allocation4 + $0x4f8] sm:$0xff]
    %v441 = vld [vmem:[%s4] sm:$0x3]
    %v443 = vlaneseq
    %v444 = vshrl.u32 %v443, 7
    %v445 = vsub.s32 0, %v444
    %v446 = vrot.slane %v441, %v445
    %v447 = vlaneseq
    %v448 = vshrl.u32 %v447, 7
    %v449 = vsub.s32 1, %v448
    %v450 = vrot.slane %v441, %v449
    %453 = vmatprep.subr.mxu0 %v312
    %454 = vmatpush1.msra.mxu0 %v311
    %455 = vmatprep.subr.mxu0 %v310
    %456 = vmatpush1.msra.mxu0 %v309
    %457 = vmatprep.subr.mxu0 %v308
    %458 = vmatpush1.msra.mxu0 %v307
    %459 = vmatprep.subr.mxu0 %v306
    %460 = vmatpush1.msra.mxu0 %v305
    %461 = vmatprep.subr.mxu0 %v304
    %462 = vmatpush1.msra.mxu0 %v303
    %463 = vmatprep.subr.mxu0 %v302
    %464 = vmatpush1.msra.mxu0 %v301
    %465 = vmatprep.subr.mxu0 %v300
    %466 = vmatpush1.msra.mxu0 %v299
    %467 = vmatprep.subr.mxu0 %v298
    %468 = vmatpush1.msra.mxu0 %v297
    %469 = vmatprep.subr.mxu0 %v296
    %470 = vmatpush1.msra.mxu0 %v295
    %471 = vmatprep.subr.mxu0 %v294
    %472 = vmatpush1.msra.mxu0 %v293
    %473 = vmatprep.subr.mxu0 %v292
    %474 = vmatpush1.msra.mxu0 %v291
    %475 = vmatprep.subr.mxu0 %v290
    %476 = vmatpush1.msra.mxu0 %v289
    %477 = vmatprep.subr.mxu0 %v288
    %478 = vmatpush1.msra.mxu0 %v287
    %479 = vmatprep.subr.mxu0 %v286
    %480 = vmatpush1.msra.mxu0 %v285
    %481 = vmatprep.subr.mxu0 %v284
    %482 = vmatpush1.msra.mxu0 %v283
    %483 = vmatprep.subr.mxu0 %v282
    %484 = vmatpush1.msra.mxu0 %v281
    %485 = vmatprep.subr.mxu0 %v344
    %486 = vmatpush2.msra.mxu0 %v343
    %487 = vmatprep.subr.mxu0 %v342
    %488 = vmatpush2.msra.mxu0 %v341
    %489 = vmatprep.subr.mxu0 %v340
    %490 = vmatpush2.msra.mxu0 %v339
    %491 = vmatprep.subr.mxu0 %v338
    %492 = vmatpush2.msra.mxu0 %v337
    %493 = vmatprep.subr.mxu0 %v336
    %494 = vmatpush2.msra.mxu0 %v335
    %495 = vmatprep.subr.mxu0 %v334
    %496 = vmatpush2.msra.mxu0 %v333
    %497 = vmatprep.subr.mxu0 %v332
    %498 = vmatpush2.msra.mxu0 %v331
    %499 = vmatprep.subr.mxu0 %v330
    %500 = vmatpush2.msra.mxu0 %v329
    %501 = vmatprep.subr.mxu0 %v328
    %502 = vmatpush2.msra.mxu0 %v327
    %503 = vmatprep.subr.mxu0 %v326
    %504 = vmatpush2.msra.mxu0 %v325
    %505 = vmatprep.subr.mxu0 %v324
    %506 = vmatpush2.msra.mxu0 %v323
    %507 = vmatprep.subr.mxu0 %v322
    %508 = vmatpush2.msra.mxu0 %v321
    %509 = vmatprep.subr.mxu0 %v320
    %510 = vmatpush2.msra.mxu0 %v319
    %511 = vmatprep.subr.mxu0 %v318
    %512 = vmatpush2.msra.mxu0 %v317
    %513 = vmatprep.subr.mxu0 %v316
    %514 = vmatpush2.msra.mxu0 %v315
    %515 = vmatprep.subr.mxu0 %v314
    %516 = vmatpush2.msra.mxu0 %v313
    %517 = vmatprep.mubr.f32.mxu0 %v277
    %518 = vmatmul.mubr.f32.gmra.mxu0 %v276
    %v519 = vpop.f32.mrf.mxu0
    %v520 = vadd.f32 %v446, %v519
    %v521 = vpop.f32.mrf.mxu0
    %v522 = vadd.f32 %v450, %v521
    %523 = vdwg.mxu0
    %524 = vmatprep.subr.mxu0 %v376
    %525 = vmatpush1.msra.mxu0 %v375
    %526 = vmatprep.subr.mxu0 %v374
    %527 = vmatpush1.msra.mxu0 %v373
    %528 = vmatprep.subr.mxu0 %v372
    %529 = vmatpush1.msra.mxu0 %v371
    %530 = vmatprep.subr.mxu0 %v370
    %531 = vmatpush1.msra.mxu0 %v369
    %532 = vmatprep.subr.mxu0 %v368
    %533 = vmatpush1.msra.mxu0 %v367
    %534 = vmatprep.subr.mxu0 %v366
    %535 = vmatpush1.msra.mxu0 %v365
    %536 = vmatprep.subr.mxu0 %v364
    %537 = vmatpush1.msra.mxu0 %v363
    %538 = vmatprep.subr.mxu0 %v362
    %539 = vmatpush1.msra.mxu0 %v361
    %540 = vmatprep.subr.mxu0 %v360
    %541 = vmatpush1.msra.mxu0 %v359
    %542 = vmatprep.subr.mxu0 %v358
    %543 = vmatpush1.msra.mxu0 %v357
    %544 = vmatprep.subr.mxu0 %v356
    %545 = vmatpush1.msra.mxu0 %v355
    %546 = vmatprep.subr.mxu0 %v354
    %547 = vmatpush1.msra.mxu0 %v353
    %548 = vmatprep.subr.mxu0 %v352
    %549 = vmatpush1.msra.mxu0 %v351
    %550 = vmatprep.subr.mxu0 %v350
    %551 = vmatpush1.msra.mxu0 %v349
    %552 = vmatprep.subr.mxu0 %v348
    %553 = vmatpush1.msra.mxu0 %v347
    %554 = vmatprep.subr.mxu0 %v346
    %555 = vmatpush1.msra.mxu0 %v345
    %556 = vmatprep.subr.mxu0 %v408
    %557 = vmatpush2.msra.mxu0 %v407
    %558 = vmatprep.subr.mxu0 %v406
    %559 = vmatpush2.msra.mxu0 %v405
    %560 = vmatprep.subr.mxu0 %v404
    %561 = vmatpush2.msra.mxu0 %v403
    %562 = vmatprep.subr.mxu0 %v402
    %563 = vmatpush2.msra.mxu0 %v401
    %564 = vmatprep.subr.mxu0 %v400
    %565 = vmatpush2.msra.mxu0 %v399
    %566 = vmatprep.subr.mxu0 %v398
    %567 = vmatpush2.msra.mxu0 %v397
    %568 = vmatprep.subr.mxu0 %v396
    %569 = vmatpush2.msra.mxu0 %v395
    %570 = vmatprep.subr.mxu0 %v394
    %571 = vmatpush2.msra.mxu0 %v393
    %572 = vmatprep.subr.mxu0 %v392
    %573 = vmatpush2.msra.mxu0 %v391
    %574 = vmatprep.subr.mxu0 %v390
    %575 = vmatpush2.msra.mxu0 %v389
    %576 = vmatprep.subr.mxu0 %v388
    %577 = vmatpush2.msra.mxu0 %v387
    %578 = vmatprep.subr.mxu0 %v386
    %579 = vmatpush2.msra.mxu0 %v385
    %580 = vmatprep.subr.mxu0 %v384
    %581 = vmatpush2.msra.mxu0 %v383
    %582 = vmatprep.subr.mxu0 %v382
    %583 = vmatpush2.msra.mxu0 %v381
    %584 = vmatprep.subr.mxu0 %v380
    %585 = vmatpush2.msra.mxu0 %v379
    %586 = vmatprep.subr.mxu0 %v378
    %587 = vmatpush2.msra.mxu0 %v377
    %588 = vmatprep.mubr.f32.mxu0 %v279
    %589 = vmatmul.mubr.f32.gmra.mxu0 %v278
    %v590 = vpop.f32.mrf.mxu0
    %v591 = vadd.f32 %v520, %v590
    %v592 = vpop.f32.mrf.mxu0
    %v593 = vadd.f32 %v522, %v592
    %594 = vdwg.mxu0
    %595 = vmatprep.subr.mxu0 %v440
    %596 = vmatpush1.msra.mxu0 %v439
    %597 = vmatprep.subr.mxu0 %v438
    %598 = vmatpush1.msra.mxu0 %v437
    %599 = vmatprep.subr.mxu0 %v436
    %600 = vmatpush1.msra.mxu0 %v435
    %601 = vmatprep.subr.mxu0 %v434
    %602 = vmatpush1.msra.mxu0 %v433
    %603 = vmatprep.subr.mxu0 %v432
    %604 = vmatpush1.msra.mxu0 %v431
    %605 = vmatprep.subr.mxu0 %v430
    %606 = vmatpush1.msra.mxu0 %v429
    %607 = vmatprep.subr.mxu0 %v428
    %608 = vmatpush1.msra.mxu0 %v427
    %609 = vmatprep.subr.mxu0 %v426
    %610 = vmatpush1.msra.mxu0 %v425
    %611 = vmatprep.subr.mxu0 %v424
    %612 = vmatpush1.msra.mxu0 %v423
    %613 = vmatprep.subr.mxu0 %v422
    %614 = vmatpush1.msra.mxu0 %v421
    %615 = vmatprep.subr.mxu0 %v420
    %616 = vmatpush1.msra.mxu0 %v419
    %617 = vmatprep.subr.mxu0 %v418
    %618 = vmatpush1.msra.mxu0 %v417
    %619 = vmatprep.subr.mxu0 %v416
    %620 = vmatpush1.msra.mxu0 %v415
    %621 = vmatprep.subr.mxu0 %v414
    %622 = vmatpush1.msra.mxu0 %v413
    %623 = vmatprep.subr.mxu0 %v412
    %624 = vmatpush1.msra.mxu0 %v411
    %625 = vmatprep.subr.mxu0 %v410
    %626 = vmatpush1.msra.mxu0 %v409
    %627 = vmatprep.subr.mxu0 0.0
    %628 = vmatpush2.msra.mxu0 0.0
    %629 = vmatprep.subr.mxu0 0.0
    %630 = vmatpush2.msra.mxu0 0.0
    %631 = vmatprep.subr.mxu0 0.0
    %632 = vmatpush2.msra.mxu0 0.0
    %633 = vmatprep.subr.mxu0 0.0
    %634 = vmatpush2.msra.mxu0 0.0
    %635 = vmatprep.subr.mxu0 0.0
    %636 = vmatpush2.msra.mxu0 0.0
    %637 = vmatprep.subr.mxu0 0.0
    %638 = vmatpush2.msra.mxu0 0.0
    %639 = vmatprep.subr.mxu0 0.0
    %640 = vmatpush2.msra.mxu0 0.0
    %641 = vmatprep.subr.mxu0 0.0
    %642 = vmatpush2.msra.mxu0 0.0
    %643 = vmatprep.subr.mxu0 0.0
    %644 = vmatpush2.msra.mxu0 0.0
    %645 = vmatprep.subr.mxu0 0.0
    %646 = vmatpush2.msra.mxu0 0.0
    %647 = vmatprep.subr.mxu0 0.0
    %648 = vmatpush2.msra.mxu0 0.0
    %649 = vmatprep.subr.mxu0 0.0
    %650 = vmatpush2.msra.mxu0 0.0
    %651 = vmatprep.subr.mxu0 0.0
    %652 = vmatpush2.msra.mxu0 0.0
    %653 = vmatprep.subr.mxu0 0.0
    %654 = vmatpush2.msra.mxu0 0.0
    %655 = vmatprep.subr.mxu0 0.0
    %656 = vmatpush2.msra.mxu0 0.0
    %657 = vmatprep.subr.mxu0 0.0
    %658 = vmatpush2.msra.mxu0 0.0
    %659 = vmatprep.mubr.f32.mxu0 0.0
    %660 = vmatmul.mubr.f32.gmra.mxu0 %v280
    %v661 = vpop.f32.mrf.mxu0
    %v662 = vadd.f32 %v591, %v661
    %v663 = vpop.f32.mrf.mxu0
    %v664 = vadd.f32 %v593, %v663
    %665 = vdwg.mxu0
    %v666 = vmul.f32 %v662, 0.5
    %v667 = vmul.f32 %v664, 0.5
    %v668 = vtanh.pop %v666
    %v669 = vtanh.pop %v667
    %v670 = vmul.f32 %v668, 0.5
    %v671 = vmul.f32 %v669, 0.5
    %v672 = vadd.f32 %v670, 0.5
    %v673 = vadd.f32 %v671, 0.5
    %v674 = vld [vmem:[%s5] sm:$0x3]
    %v676 = vlaneseq
    %v677 = vshrl.u32 %v676, 7
    %v678 = vsub.s32 0, %v677
    %v679 = vrot.slane %v674, %v678
    %v680 = vlaneseq
    %v681 = vshrl.u32 %v680, 7
    %v682 = vsub.s32 1, %v681
    %v683 = vrot.slane %v674, %v682
    %v686 = vmul.f32 %v672, %v679
    %v687 = vmul.f32 %v673, %v683
    %v688 = vadd.f32 %v686, %v687
    %689 = vadd.xlane.f32.xlu0 %v688
    %v690 = vpop.xlane.xlu0 %689
    %vm691 = vcmask 7168
    %692 = vst.msk [vmem:[%s6] sm:$0xff] %vm691, %v690
    // Predicated region
    $region34: #{tpu_custom_call.1} parent=1 // pred_check
      _
    $region35: #{tpu_custom_call.1} parent=1 // pred_check_branch
      %694 = sbr.rel (0) target = $region37
    $region36: #{tpu_custom_call.1} parent=1 // pred_region
      _
    $region37: #{tpu_custom_call.1} parent=1 // pred_fallthru
      _
    // Predicated region
    $region38: #{tpu_custom_call.1} parent=1 // pred_check
      _
    $region39: #{tpu_custom_call.1} parent=1 // pred_check_branch
      %696 = sbr.rel (0) target = $region41
    $region40: #{tpu_custom_call.1} parent=1 // pred_region
      _
    $region41: #{tpu_custom_call.1} parent=1 // pred_fallthru
      _
    %697 = vsyncpa [#allocation3], 1
    %698 = vsyncpa [#allocation5], 1

</llo_original>
